<compile_context>
chip_gen: v6e
topology: v6e:2x2x1
jax: 0.10.0
libtpu: 0.0.40
codegen_flags: <defaults>
</compile_context>

<pallas_src>
from functools import partial

import jax
import jax.numpy as jnp
from jax.experimental import pallas as pl
from jax.experimental.pallas import tpu as pltpu


def _kl_kernel(post_ref, prior_ref, out_ref, *, valid_rows, block_rows, needs_mask):
    p = post_ref[...].astype(jnp.float32)   # (TB, Dp) posterior probs
    q = prior_ref[...].astype(jnp.float32)  # (1, Dp)  prior probs (broadcasts)

    # q-side logs / masks stay at (1, Dp): computed once per block, not per row.
    log_q = jnp.log(q)
    log1m_q = jnp.log1p(-q)
    q_is_zero = q == 0.0
    q_is_one = q == 1.0

    inf = jnp.float32(jnp.inf)
    zero = jnp.float32(0.0)

    # t1 = p * log(p / q), with PyTorch's edge-case handling order:
    #   set inf where q == 0, then set 0 where p == 0 (p==0 wins).
    t1 = p * (jnp.log(p) - log_q)
    t1 = jnp.where(q_is_zero, inf, t1)
    t1 = jnp.where(p == 0.0, zero, t1)

    # t2 = (1-p) * log((1-p) / (1-q)), inf where q == 1, 0 where p == 1.
    t2 = (1.0 - p) * (jnp.log1p(-p) - log1m_q)
    t2 = jnp.where(q_is_one, inf, t2)
    t2 = jnp.where(p == 1.0, zero, t2)

    kl = t1 + t2                                          # (TB, Dp)

    if needs_mask:
        # Zero out padded rows (only present when B doesn't divide the block).
        row0 = pl.program_id(0) * block_rows
        rows = row0 + jax.lax.broadcasted_iota(jnp.int32, kl.shape, 0)
        kl = jnp.where(rows < valid_rows, kl, zero)

    s = jnp.sum(kl)                                       # scalar partial sum
    # Lane-dense (8, 128) store of the per-block partial (unmasked vst).
    out_ref[...] = jnp.broadcast_to(s, out_ref.shape)


def sparse_bernoulli_kl(post_probs: jax.Array, prior_probs: jax.Array,
                        *, max_block_rows: int = 256) -> jax.Array:
    """post_probs: (B, D) float32/bf16, prior_probs: (D,) -> scalar float32."""
    B, D = post_probs.shape
    assert prior_probs.shape == (D,)

    # ---- lane-dense packing: fold batch rows into lanes while it fits 128 ----
    pack = 1
    while D * pack * 2 <= 128 and B % (pack * 2) == 0:
        pack *= 2
    Bp, Dp = B // pack, D * pack
    post = post_probs.reshape(Bp, Dp)
    prior_row = jnp.tile(prior_probs.astype(jnp.float32).reshape(1, D), (1, pack))

    # ---- choose row block: multiple of 8, bounded VMEM footprint ----
    bytes_per_el = post.dtype.itemsize
    max_block_bytes = 2 * 1024 * 1024          # per buffer; x2 for double-buffering
    tb = max(1, min(max_block_rows, max_block_bytes // max(1, Dp * bytes_per_el)))
    tb = max(8, (tb // 8) * 8)
    tb = min(tb, max(8, ((Bp + 7) // 8) * 8))  # don't over-pad tiny batches

    Bp_pad = ((Bp + tb - 1) // tb) * tb
    needs_mask = Bp_pad != Bp
    if needs_mask:
        pad = jnp.full((Bp_pad - Bp, Dp), 0.5, dtype=post.dtype)
        post = jnp.concatenate([post, pad], axis=0)

    num_blocks = Bp_pad // tb

    kernel = partial(_kl_kernel, valid_rows=Bp, block_rows=tb,
                     needs_mask=needs_mask)

    partials = pl.pallas_call(
        kernel,
        out_shape=jax.ShapeDtypeStruct((num_blocks, 8, 128), jnp.float32),
        grid=(num_blocks,),
        in_specs=[
            pl.BlockSpec((tb, Dp), lambda i: (i, 0)),      # posterior block
            pl.BlockSpec((1, Dp), lambda i: (0, 0)),       # prior row (shared)
        ],
        out_specs=pl.BlockSpec((1, 8, 128), lambda i: (i, 0, 0)),
        compiler_params=pltpu.CompilerParams(
            dimension_semantics=("parallel",),
            vmem_limit_bytes=32 * 1024 * 1024,
        ),
    )(post, prior_row)

    # Tiny final reduce (left to XLA): mean over the original batch.
    return jnp.sum(partials[:, 0, 0]) / jnp.float32(B)


def _reference_kl(post_probs, prior_probs):
    p = post_probs.astype(jnp.float32)
    q = prior_probs.reshape(1, -1).astype(jnp.float32)
    t1 = p * (jnp.log(p) - jnp.log(q))
    t1 = jnp.where(q == 0.0, jnp.inf, t1)
    t1 = jnp.where(p == 0.0, 0.0, t1)
    t2 = (1.0 - p) * (jnp.log1p(-p) - jnp.log1p(-q))
    t2 = jnp.where(q == 1.0, jnp.inf, t2)
    t2 = jnp.where(p == 1.0, 0.0, t2)
    return jnp.mean(jnp.sum(t1 + t2, axis=-1))


if __name__ == "__main__":
    # Module config (deterministic, no checkpoint): prob=0.2, shape=D
    D = 32
    prob = 0.2
    prior_probs = jnp.ones((D,), dtype=jnp.float32) * prob  # nn.Parameter init

    key = jax.random.PRNGKey(0)

    # Small shape consistent with the module: batch=2, hidden=32.
    B = 2
    post_probs = jax.random.uniform(key, (B, D), dtype=jnp.float32,
                                    minval=1e-3, maxval=1.0 - 1e-3)
    kl = jax.block_until_ready(sparse_bernoulli_kl(post_probs, prior_probs))
    ref = _reference_kl(post_probs, prior_probs)
    assert jnp.allclose(kl, ref, rtol=1e-4, atol=1e-5), (kl, ref)

    # Exercise the tiled / packed paths (multi-block grid, ragged batch).
    for b, mbr in ((64, 8), (40, 8)):
        k2 = jax.random.fold_in(key, b)
        pp = jax.random.uniform(k2, (b, D), dtype=jnp.float32,
                                minval=1e-3, maxval=1.0 - 1e-3)
        got = jax.block_until_ready(
            sparse_bernoulli_kl(pp, prior_probs, max_block_rows=mbr))
        want = _reference_kl(pp, prior_probs)
        assert jnp.allclose(got, want, rtol=1e-4, atol=1e-5), (b, got, want)

    print("KERNEL_OK")
</pallas_src>

<mosaic_0001>
module attributes {stable_mosaic.version = 11 : i64} {
  func.func @_kl_kernel(%arg0: i32, %arg1: memref<8x64xf32, #tpu.memory_space<vmem>>, %arg2: memref<1x64xf32, #tpu.memory_space<vmem>>, %arg3: memref<1x8x128xf32, #tpu.memory_space<vmem>>) attributes {dimension_semantics = [#tpu.dimension_semantics<parallel>], iteration_bounds = array<i64: 1>, scalar_prefetch = 0 : i64, scratch_operands = 0 : i64, tpu.core_type = #tpu.core_type<tc>, window_params = [{transform_indices = @transform_0, window_bounds = array<i64: 8, 64>}, {pipeline_mode = #tpu.pipeline_mode<synchronous>, transform_indices = @transform_1, window_bounds = array<i64: 1, 64>}, {transform_indices = @transform_2, window_bounds = array<i64: 1, 8, 128>}]} {
    %c0 = arith.constant 0 : index
    %c0_0 = arith.constant 0 : index
    %0 = vector.load %arg1[%c0, %c0_0] : memref<8x64xf32, #tpu.memory_space<vmem>>, vector<8x64xf32>
    %c0_1 = arith.constant 0 : index
    %c0_2 = arith.constant 0 : index
    %1 = vector.load %arg2[%c0_1, %c0_2] : memref<1x64xf32, #tpu.memory_space<vmem>>, vector<1x64xf32>
    %2 = math.log %1 : vector<1x64xf32>
    %cst = arith.constant 0.000000e+00 : f32
    %3 = vector.broadcast %cst : f32 to vector<1x64xf32>
    %4 = arith.subf %3, %1 : vector<1x64xf32>
    %5 = math.log1p %4 : vector<1x64xf32>
    %cst_3 = arith.constant 0.000000e+00 : f32
    %6 = vector.broadcast %cst_3 : f32 to vector<1x64xf32>
    %7 = arith.cmpf oeq, %1, %6 : vector<1x64xf32>
    %cst_4 = arith.constant 1.000000e+00 : f32
    %8 = vector.broadcast %cst_4 : f32 to vector<1x64xf32>
    %9 = arith.cmpf oeq, %1, %8 : vector<1x64xf32>
    %10 = math.log %0 : vector<8x64xf32>
    %11 = vector.broadcast %2 : vector<1x64xf32> to vector<8x64xf32>
    %12 = arith.subf %10, %11 : vector<8x64xf32>
    %13 = arith.mulf %0, %12 : vector<8x64xf32>
    %cst_5 = arith.constant 0x7F800000 : f32
    %14 = vector.shape_cast %7 : vector<1x64xi1> to vector<1x64xi1>
    %15 = vector.broadcast %14 : vector<1x64xi1> to vector<8x64xi1>
    %16 = vector.broadcast %cst_5 : f32 to vector<8x64xf32>
    %17 = arith.select %15, %16, %13 : vector<8x64xi1>, vector<8x64xf32>
    %cst_6 = arith.constant 0.000000e+00 : f32
    %18 = vector.broadcast %cst_6 : f32 to vector<8x64xf32>
    %19 = arith.cmpf oeq, %0, %18 : vector<8x64xf32>
    %cst_7 = arith.constant 0.000000e+00 : f32
    %20 = vector.broadcast %cst_7 : f32 to vector<8x64xf32>
    %21 = arith.select %19, %20, %17 : vector<8x64xi1>, vector<8x64xf32>
    %cst_8 = arith.constant 1.000000e+00 : f32
    %22 = vector.broadcast %cst_8 : f32 to vector<8x64xf32>
    %23 = arith.subf %22, %0 : vector<8x64xf32>
    %cst_9 = arith.constant 0.000000e+00 : f32
    %24 = vector.broadcast %cst_9 : f32 to vector<8x64xf32>
    %25 = arith.subf %24, %0 : vector<8x64xf32>
    %26 = math.log1p %25 : vector<8x64xf32>
    %27 = vector.broadcast %5 : vector<1x64xf32> to vector<8x64xf32>
    %28 = arith.subf %26, %27 : vector<8x64xf32>
    %29 = arith.mulf %23, %28 : vector<8x64xf32>
    %cst_10 = arith.constant 0x7F800000 : f32
    %30 = vector.shape_cast %9 : vector<1x64xi1> to vector<1x64xi1>
    %31 = vector.broadcast %30 : vector<1x64xi1> to vector<8x64xi1>
    %32 = vector.broadcast %cst_10 : f32 to vector<8x64xf32>
    %33 = arith.select %31, %32, %29 : vector<8x64xi1>, vector<8x64xf32>
    %cst_11 = arith.constant 1.000000e+00 : f32
    %34 = vector.broadcast %cst_11 : f32 to vector<8x64xf32>
    %35 = arith.cmpf oeq, %0, %34 : vector<8x64xf32>
    %cst_12 = arith.constant 0.000000e+00 : f32
    %36 = vector.broadcast %cst_12 : f32 to vector<8x64xf32>
    %37 = arith.select %35, %36, %33 : vector<8x64xi1>, vector<8x64xf32>
    %38 = arith.addf %21, %37 : vector<8x64xf32>
    %c8_i32 = arith.constant 8 : i32
    %39 = arith.muli %arg0, %c8_i32 : i32
    %40 = tpu.iota {dimensions = array<i32: 0>} : vector<8x64xi32>
    %41 = vector.broadcast %39 : i32 to vector<8x64xi32>
    %42 = arith.addi %41, %40 : vector<8x64xi32>
    %c1_i32 = arith.constant 1 : i32
    %43 = vector.broadcast %c1_i32 : i32 to vector<8x64xi32>
    %44 = arith.cmpi slt, %42, %43 : vector<8x64xi32>
    %cst_13 = arith.constant 0.000000e+00 : f32
    %45 = vector.broadcast %cst_13 : f32 to vector<8x64xf32>
    %46 = arith.select %44, %38, %45 : vector<8x64xi1>, vector<8x64xf32>
    %47 = vector.shape_cast %46 : vector<8x64xf32> to vector<1x8x64xf32>
    %cst_14 = arith.constant dense<0.000000e+00> : vector<1xf32>
    %48 = vector.multi_reduction <add>, %47, %cst_14 [1, 2] : vector<1x8x64xf32> to vector<1xf32>
    %49 = vector.shape_cast %48 : vector<1xf32> to vector<1x1x1xf32>
    %50 = vector.extract %49[0, 0, 0] : f32 from vector<1x1x1xf32>
    %51 = vector.broadcast %50 : f32 to vector<1x8x128xf32>
    %c0_15 = arith.constant 0 : index
    %c0_16 = arith.constant 0 : index
    %c0_17 = arith.constant 0 : index
    %52 = vector.load %arg3[%c0_15, %c0_16, %c0_17] : memref<1x8x128xf32, #tpu.memory_space<vmem>>, vector<1x8x128xf32>
    tpu.vector_store %arg3[%c0_15, %c0_16, %c0_17], %51 {strides = array<i32>} : memref<1x8x128xf32, #tpu.memory_space<vmem>>, vector<1x8x128xf32>,
    return
  }
  func.func @transform_0(%arg0: i32) -> (i32, i32) {
    %c0_i32 = arith.constant 0 : i32
    %c0_i32_0 = arith.constant 0 : i32
    return %arg0, %c0_i32 : i32, i32
  }
  func.func @transform_1(%arg0: i32) -> (i32, i32) {
    %c0_i32 = arith.constant 0 : i32
    %c0_i32_0 = arith.constant 0 : i32
    %c0_i32_1 = arith.constant 0 : i32
    return %c0_i32, %c0_i32_0 : i32, i32
  }
  func.func @transform_2(%arg0: i32) -> (i32, i32, i32) {
    %c0_i32 = arith.constant 0 : i32
    %c0_i32_0 = arith.constant 0 : i32
    %c0_i32_1 = arith.constant 0 : i32
    return %arg0, %c0_i32, %c0_i32_0 : i32, i32, i32
  }
}

</mosaic_0001>

<llo_original>
// kernel: tpu_custom_call.1
$region0: #{tpu_custom_call.1}
  #allocation0 [shape = 'u32[]', space=smem, size = 0x4, offset = 0x4, fixed_abs, tag = 'smem constant byte address 0x4 - core index']
  #allocation1 [shape = 'u32[144,128]{1,0:T(1,128)}', space=vmem, size = 0x12000, scoped, tag = 'internal scratch']
  %s0 = inlined_call_operand.hbm [shape: f32[8,64], index: 0, kind: input, shape index: {}]
  %s1 = inlined_call_operand.vmem [shape: f32[1,64], index: 1, kind: input, shape index: {}]
  %s2 = inlined_call_operand.hbm [shape: f32[1,8,128], index: 2, kind: output, shape index: {}]
  %s3 = sld [smem:[#allocation0]]
  $region22: #{tpu_custom_call.1} parent=0
    _
  %s5 = ssub.s32 1, %s3
  %s6 = scalar_select 0, %s5, %s3
  $region1: #{tpu_custom_call.1} parent=0
    #allocation2 [shape = 'u8[4096]{0}', space=vmem, size = 0x1000, scoped, tag = 'input window, operand 0, single buffered']
    #allocation3 [shape = 's32[1]{0}', space=sflag, size = 0x4, scoped, tag = 'scoped memory for tpu_custom_call.1']
    #allocation4 [shape = 's32[1]{0}', space=sflag, size = 0x4, scoped, tag = 'scoped memory for tpu_custom_call.1']
    #allocation5 [shape = 'u8[4096]{0}', space=vmem, size = 0x1000, scoped, tag = 'output window, operand 0, single buffered']
    %7 = vsyncpa [#allocation3], 0
    %8 = vsyncpa [#allocation4], 0
    // Predicated region
    $region2: #{tpu_custom_call.1} parent=1 // pred_check
      _
    $region3: #{tpu_custom_call.1} parent=1 // pred_check_branch
      %10 = sbr.rel (0) target = $region5
    $region4: #{tpu_custom_call.1} parent=1 // pred_region
      %s12 = ssub.s32 128, 128
      %13 = vsyncadd [#allocation3], %s12
      %s15 = sshll.u32 [#allocation2], 4
      %s16 = int_to_ptr.vmem [resolvable:$true] %s15
      %18 = dma.hbm_to_vmem [thread:$0]  %s0, 128, %s16, [#allocation3]
    $region5: #{tpu_custom_call.1} parent=1 // pred_fallthru
      _
    // Predicated region
    $region6: #{tpu_custom_call.1} parent=1 // pred_check
      _
    $region7: #{tpu_custom_call.1} parent=1 // pred_check_branch
      %20 = sbr.rel (0) target = $region9
    $region8: #{tpu_custom_call.1} parent=1 // pred_region
      _
    $region9: #{tpu_custom_call.1} parent=1 // pred_fallthru
      _
    // Predicated region
    $region10: #{tpu_custom_call.1} parent=1 // pred_check
      _
    $region11: #{tpu_custom_call.1} parent=1 // pred_check_branch
      %22 = sbr.rel (0) target = $region13
    $region12: #{tpu_custom_call.1} parent=1 // pred_region
      %23 = dma.done [#allocation3], 128
    $region13: #{tpu_custom_call.1} parent=1 // pred_fallthru
      _
    %v24 = vld [vmem:[#allocation2] sm:$0xff]
    %v25 = vld [vmem:[%s1] sm:$0x1]
    %v26 = vlog2.pop %v25
    %v27 = vmul.f32 %v26, 0.6931472
    %v28 = vsub.f32 0.0, %v25
    %v29 = vadd.f32 %v28, 1.0
    %v30 = vlog2.pop %v29
    %v31 = vmul.f32 %v30, 0.6931472
    %v32 = vmul.f32 -0.5, %v28
    %v33 = vadd.f32 %v32, 1.0
    %v34 = vmul.f32 %v33, %v28
    %v35 = vand.u32 2147483647, %v28
    %vm36 = vcmp.lt.f32.partialorder %v35, 0.0004427343
    %v37 = vsel %vm36, %v34, %v31
    %vm38 = vcmp.eq.f32.partialorder %v25, 0.0
    %vm39 = vcmp.eq.f32.partialorder %v25, 1.0
    %v40 = vlog2.pop %v24
    %v41 = vmul.f32 %v40, 0.6931472
    %v43 = vlaneseq
    %v44 = vshrl.u32 %v43, 7
    %v45 = vsub.s32 0, %v44
    %v46 = vrot.slane %v27, %v45
    %v48 = vsub.f32 %v41, %v46
    %v49 = vmul.f32 %v24, %v48
    %v50 = vsel %vm38, 1, 0
    %v51 = vlaneseq
    %v52 = vshrl.u32 %v51, 7
    %v53 = vsub.s32 0, %v52
    %v54 = vrot.slane %v50, %v53
    %vm55 = vcmp.eq.s32.totalorder %v54, 1
    %v56 = vsel %vm55, inf, %v49
    %vm57 = vcmp.eq.f32.partialorder %v24, 0.0
    %v58 = vsel %vm57, 0.0, %v56
    %v59 = vsub.f32 1.0, %v24
    %v60 = vsub.f32 0.0, %v24
    %v61 = vadd.f32 %v60, 1.0
    %v62 = vlog2.pop %v61
    %v63 = vmul.f32 %v62, 0.6931472
    %v64 = vmul.f32 -0.5, %v60
    %v65 = vadd.f32 %v64, 1.0
    %v66 = vmul.f32 %v65, %v60
    %v67 = vand.u32 2147483647, %v60
    %vm68 = vcmp.lt.f32.partialorder %v67, 0.0004427343
    %v69 = vsel %vm68, %v66, %v63
    %v71 = vlaneseq
    %v72 = vshrl.u32 %v71, 7
    %v73 = vsub.s32 0, %v72
    %v74 = vrot.slane %v37, %v73
    %v76 = vsub.f32 %v69, %v74
    %v77 = vmul.f32 %v59, %v76
    %v78 = vsel %vm39, 1, 0
    %v79 = vlaneseq
    %v80 = vshrl.u32 %v79, 7
    %v81 = vsub.s32 0, %v80
    %v82 = vrot.slane %v78, %v81
    %vm83 = vcmp.eq.s32.totalorder %v82, 1
    %v84 = vsel %vm83, inf, %v77
    %vm85 = vcmp.eq.f32.partialorder %v24, 1.0
    %v86 = vsel %vm85, 0.0, %v84
    %v87 = vadd.f32 %v58, %v86
    %s88 = smul.u32 0, 8
    %v89 = vlaneseq
    %v90 = vshrl.u32 %v89, 7
    %v91 = vstv %s88
    %v92 = vadd.s32 %v91, %v90
    %vm93 = vcmp.lt.s32.totalorder %v92, 1
    %v94 = vsel %vm93, %v87, 0.0
    %vm95 = vcmask 523264
    %v96 = vsel %vm95, %v94, 0.0
    %97 = vadd.xlane.f32.xlu0 %v96
    %v98 = vpop.xlane.xlu0 %97
    %v99 = vrot.slane %v98, 4
    %v100 = vadd.f32 %v98, %v99
    %v101 = vrot.slane %v100, 2
    %v102 = vadd.f32 %v100, %v101
    %v103 = vrot.slane %v102, 1
    %v104 = vadd.f32 %v102, %v103
    %s105 = vtos %v104
    %v106 = vstv %s105
    %107 = vst [vmem:[#allocation5] sm:$0xff] %v106
    // Predicated region
    $region14: #{tpu_custom_call.1} parent=1 // pred_check
      _
    $region15: #{tpu_custom_call.1} parent=1 // pred_check_branch
      %109 = sbr.rel (0) target = $region17
    $region16: #{tpu_custom_call.1} parent=1 // pred_region
      %s111 = ssub.s32 128, 128
      %112 = vsyncadd [#allocation4], %s111
      %s114 = sshll.u32 [#allocation5], 4
      %s115 = int_to_ptr.vmem [resolvable:$true] %s114
      %117 = dma.vmem_to_hbm [thread:$0]  %s115, 128, %s2, [#allocation4]
    $region17: #{tpu_custom_call.1} parent=1 // pred_fallthru
      _
    // Predicated region
    $region18: #{tpu_custom_call.1} parent=1 // pred_check
      _
    $region19: #{tpu_custom_call.1} parent=1 // pred_check_branch
      %119 = sbr.rel (0) target = $region21
    $region20: #{tpu_custom_call.1} parent=1 // pred_region
      %120 = dma.done [#allocation4], 128
    $region21: #{tpu_custom_call.1} parent=1 // pred_fallthru
      _
    %121 = vsyncpa [#allocation3], 1
    %122 = vsyncpa [#allocation4], 1

</llo_original>
